<compile_context>
chip_gen: v7x
topology: tpu7x:2x2x1
jax: 0.10.0
libtpu: 0.0.40
codegen_flags: <defaults>
</compile_context>

<pallas_src>
import functools

import jax
import jax.numpy as jnp
from jax.experimental import pallas as pl
from jax.experimental.pallas import tpu as pltpu


def _round_up(x, m):
    return ((x + m - 1) // m) * m


def _cdiv(a, b):
    return (a + b - 1) // b


# ---------------------------------------------------------------------------
# Fused kernel: chain of (matmul + bias [+ SiLU]) on one activation tile
# ---------------------------------------------------------------------------
def _mlp_kernel(*refs, n_layers, apply_final_act):
    """refs = (x_ref, w_0, b_0, ..., w_{L-1}, b_{L-1}, o_ref)

    x_ref : (tm, d0)      f32 or bf16  activation tile for this grid step
    w_l   : (d_l, d_{l+1}) bf16        full weight, VMEM-resident, single-buffered
    b_l   : (1, d_{l+1})   f32         full bias,   VMEM-resident, single-buffered
    o_ref : (tm, d_L)      f32 (final group) / bf16 (intermediate group)
    """
    x_ref = refs[0]
    o_ref = refs[-1]
    wb = refs[1:-1]

    # Cast to bf16 inside the kernel (VPU, hidden under the MXU) instead of a
    # separate un-fused XLA cast op in the wrapper.
    y = x_ref[...].astype(jnp.bfloat16)

    for l in range(n_layers):
        w = wb[2 * l][...]
        b = wb[2 * l + 1][...]
        # bf16 x bf16 MXU matmul, f32 accumulation; bias-add in f32.
        acc = jnp.dot(y, w, preferred_element_type=jnp.float32) + b
        is_last = l == n_layers - 1
        if (not is_last) or apply_final_act:
            # SiLU: x * sigmoid(x).  exp -> EUP, approx reciprocal -> EUP,
            # keeping the VALU free (important on v5e with narrow dims).
            sig = pl.reciprocal(1.0 + jnp.exp(-acc), approx=True)
            acc = acc * sig
        if not is_last:
            y = acc.astype(jnp.bfloat16)   # repack for the next MXU matmul
        else:
            y = acc
    o_ref[...] = y.astype(o_ref.dtype)


def _fused_group_call(x_p, group, apply_final_act, tm, out_dtype):
    """One pallas_call over a group of consecutive layers (weights resident)."""
    M_pad, d_in = x_p.shape
    n_layers = len(group)
    d_out = group[-1][0].shape[1]

    wb_inputs, wb_specs = [], []
    weight_bytes = 0
    for (w, b) in group:
        wb_inputs += [w, b]
        wb_specs += [
            pl.BlockSpec(w.shape, lambda i: (0, 0),
                         pipeline_mode=pl.Buffered(buffer_count=1)),
            pl.BlockSpec(b.shape, lambda i: (0, 0),
                         pipeline_mode=pl.Buffered(buffer_count=1)),
        ]
        weight_bytes += w.size * w.dtype.itemsize + b.size * b.dtype.itemsize

    # Explicit scoped-VMEM limit: resident (single-buffered) weights + double
    # buffered activation/output tiles + f32 intermediates, with headroom.
    # Capped at 48 MiB so it leaves slack on v7x's 64 MiB physical VMEM while
    # still lifting v5e's 16 MiB / v6e's 32 MiB defaults.
    max_width = max(max(w.shape) for w, _ in group)
    est = (weight_bytes
           + 2 * tm * d_in * x_p.dtype.itemsize
           + 2 * tm * d_out * jnp.dtype(out_dtype).itemsize
           + 2 * tm * max_width * 4)
    vmem_limit = int(min(max(2 * est, 32 << 20), 48 << 20))

    # TODO(synk): if the *widest single layer* alone exceeds the VMEM budget,
    # add a d_out tiling grid axis with a VMEM accumulator instead of grouping.
    return pl.pallas_call(
        functools.partial(_mlp_kernel, n_layers=n_layers,
                          apply_final_act=apply_final_act),
        out_shape=jax.ShapeDtypeStruct((M_pad, d_out), out_dtype),
        grid=(M_pad // tm,),
        in_specs=[pl.BlockSpec((tm, d_in), lambda i: (i, 0))] + wb_specs,
        out_specs=pl.BlockSpec((tm, d_out), lambda i: (i, 0)),
        compiler_params=pltpu.CompilerParams(
            dimension_semantics=("parallel",),
            vmem_limit_bytes=vmem_limit),
    )(x_p, *wb_inputs)


def mlp_pallas(x, params, *, tm=None, vmem_budget_bytes=40 << 20):
    """Forward pass of MLP(*dims).

    x: (M, dims[0]) f32.
    params: list of (w: bf16 (d_in, d_out), b: f32 (1, d_out)) from
            prepare_mlp_params (weights pre-converted ONCE, not per call).
    """
    M, d_in = x.shape
    n_layers = len(params)
    assert n_layers >= 1
    assert params[0][0].shape[0] == d_in

    # Batch tile: multiple of 16 (bf16 sublane packing), up to 512 rows, sized
    # so the last tile isn't mostly padding, and >=2 grid steps when possible
    # so the "parallel" axis actually uses both v7x TensorCores.
    if tm is None:
        n_tiles = max(_cdiv(M, 512), 1)
        if n_tiles == 1 and M >= 32:
            n_tiles = 2
        tm = _round_up(_cdiv(M, n_tiles), 16)
    M_pad = _round_up(M, tm)
    x_p = jnp.pad(x, ((0, M_pad - M), (0, 0))) if M_pad != M else x

    # Group consecutive layers so each group's resident weights fit the budget.
    groups, cur, cur_bytes = [], [], 0
    for (w, b) in params:
        nbytes = w.size * w.dtype.itemsize + b.size * b.dtype.itemsize
        if cur and cur_bytes + nbytes > vmem_budget_bytes:
            groups.append(cur)
            cur, cur_bytes = [], 0
        cur.append((w, b))
        cur_bytes += nbytes
    groups.append(cur)

    # NOTE: the final output width here is d_out=32 (<128 lanes) -> masked
    # partial stores; fuse the consumer into this kernel if writeback binds.
    y = x_p
    n_done = 0
    for group in groups:
        n_done += len(group)
        is_final_group = n_done == n_layers
        y = _fused_group_call(
            y, group,
            apply_final_act=not is_final_group,          # SiLU between layers only
            tm=tm,
            out_dtype=x.dtype if is_final_group else jnp.bfloat16,
        )
    return y[:M] if M_pad != M else y


# ---------------------------------------------------------------------------
# Parameter init mirroring torch.nn.Linear's U(-1/sqrt(fan_in), 1/sqrt(fan_in))
# ---------------------------------------------------------------------------
def init_mlp_params(key, dims):
    assert len(dims) >= 2, "must have at least two dimensions"
    params = []
    for d_in, d_out in zip(dims[:-1], dims[1:]):
        key, kw, kb = jax.random.split(key, 3)
        bound = 1.0 / (d_in ** 0.5)
        w = jax.random.uniform(kw, (d_in, d_out), jnp.float32, -bound, bound)
        b = jax.random.uniform(kb, (1, d_out), jnp.float32, -bound, bound)
        params.append((w, b))
    return params


def prepare_mlp_params(params_f32):
    """One-time conversion at model load: weights -> bf16, biases -> f32 (1, d)."""
    return [(w.astype(jnp.bfloat16), b.reshape(1, -1).astype(jnp.float32))
            for (w, b) in params_f32]


# ---------------------------------------------------------------------------
if __name__ == "__main__":
    key = jax.random.PRNGKey(0)
    key, kx = jax.random.split(key)

    dims = (32, 64, 32)          # small 2-layer MLP: Linear -> SiLU -> Linear
    batch = 8
    x = jax.random.normal(kx, (batch, dims[0]), dtype=jnp.float32)
    params_f32 = init_mlp_params(key, dims)
    params = prepare_mlp_params(params_f32)   # bf16 weights, converted once

    out = jax.block_until_ready(mlp_pallas(x, params))
    assert out.shape == (batch, dims[-1]), out.shape

    # Pure f32 reference (PyTorch semantics); bf16 operands -> modest tolerance.
    ref = x
    for ind, (w, b) in enumerate(params_f32, start=1):
        ref = ref @ w + b
        if ind != len(params_f32):
            ref = ref * jax.nn.sigmoid(ref)
    max_err = float(jnp.max(jnp.abs(out - ref)))
    assert jnp.allclose(out, ref, atol=5e-2, rtol=5e-2), max_err

    # Also exercise the layer-grouped (multi-pallas_call) fallback path.
    out2 = jax.block_until_ready(
        mlp_pallas(x, params, vmem_budget_bytes=1 << 12))
    assert out2.shape == (batch, dims[-1])
    assert jnp.allclose(out2, ref, atol=5e-2, rtol=5e-2), float(
        jnp.max(jnp.abs(out2 - ref)))

    print("KERNEL_OK")
</pallas_src>

<mosaic_0001>
module attributes {stable_mosaic.version = 11 : i64} {
  func.func @_mlp_kernel(%arg0: i32, %arg1: memref<16x32xf32, #tpu.memory_space<vmem>>, %arg2: memref<32x64xbf16, #tpu.memory_space<vmem>>, %arg3: memref<1x64xf32, #tpu.memory_space<vmem>>, %arg4: memref<64x32xbf16, #tpu.memory_space<vmem>>, %arg5: memref<1x32xf32, #tpu.memory_space<vmem>>, %arg6: memref<16x32xf32, #tpu.memory_space<vmem>>) attributes {dimension_semantics = [#tpu.dimension_semantics<parallel>], iteration_bounds = array<i64: 1>, scalar_prefetch = 0 : i64, scratch_operands = 0 : i64, tpu.core_type = #tpu.core_type<tc>, window_params = [{transform_indices = @transform_0, window_bounds = array<i64: 16, 32>}, {pipeline_mode = #tpu.pipeline_mode<synchronous>, transform_indices = @transform_1, window_bounds = array<i64: 32, 64>}, {pipeline_mode = #tpu.pipeline_mode<synchronous>, transform_indices = @transform_2, window_bounds = array<i64: 1, 64>}, {pipeline_mode = #tpu.pipeline_mode<synchronous>, transform_indices = @transform_3, window_bounds = array<i64: 64, 32>}, {pipeline_mode = #tpu.pipeline_mode<synchronous>, transform_indices = @transform_4, window_bounds = array<i64: 1, 32>}, {transform_indices = @transform_5, window_bounds = array<i64: 16, 32>}]} {
    %c0 = arith.constant 0 : index
    %c0_0 = arith.constant 0 : index
    %0 = vector.load %arg1[%c0, %c0_0] : memref<16x32xf32, #tpu.memory_space<vmem>>, vector<16x32xf32>
    %1 = arith.truncf %0 : vector<16x32xf32> to vector<16x32xbf16>
    %c0_1 = arith.constant 0 : index
    %c0_2 = arith.constant 0 : index
    %2 = vector.load %arg2[%c0_1, %c0_2] : memref<32x64xbf16, #tpu.memory_space<vmem>>, vector<32x64xbf16>
    %c0_3 = arith.constant 0 : index
    %c0_4 = arith.constant 0 : index
    %3 = vector.load %arg3[%c0_3, %c0_4] : memref<1x64xf32, #tpu.memory_space<vmem>>, vector<1x64xf32>
    %cst = arith.constant dense<0.000000e+00> : vector<16x64xf32>
    %4 = tpu.matmul %1, %2, %cst {dimension_numbers = #tpu.dot_dimension_numbers<[1], [0], [0], [1], [0, 0, 1, 1], [], []>} : vector<16x32xbf16>, vector<32x64xbf16>, vector<16x64xf32> -> vector<16x64xf32>
    %5 = vector.broadcast %3 : vector<1x64xf32> to vector<16x64xf32>
    %6 = arith.addf %4, %5 : vector<16x64xf32>
    %cst_5 = arith.constant 0.000000e+00 : f32
    %7 = vector.broadcast %cst_5 : f32 to vector<16x64xf32>
    %8 = arith.subf %7, %6 : vector<16x64xf32>
    %9 = math.exp %8 : vector<16x64xf32>
    %cst_6 = arith.constant 1.000000e+00 : f32
    %10 = vector.broadcast %cst_6 : f32 to vector<16x64xf32>
    %11 = arith.addf %10, %9 : vector<16x64xf32>
    %12 = tpu.reciprocal %11 {approx = true} : vector<16x64xf32> -> vector<16x64xf32>
    %13 = arith.mulf %6, %12 : vector<16x64xf32>
    %14 = arith.truncf %13 : vector<16x64xf32> to vector<16x64xbf16>
    %c0_7 = arith.constant 0 : index
    %c0_8 = arith.constant 0 : index
    %15 = vector.load %arg4[%c0_7, %c0_8] : memref<64x32xbf16, #tpu.memory_space<vmem>>, vector<64x32xbf16>
    %c0_9 = arith.constant 0 : index
    %c0_10 = arith.constant 0 : index
    %16 = vector.load %arg5[%c0_9, %c0_10] : memref<1x32xf32, #tpu.memory_space<vmem>>, vector<1x32xf32>
    %cst_11 = arith.constant dense<0.000000e+00> : vector<16x32xf32>
    %17 = tpu.matmul %14, %15, %cst_11 {dimension_numbers = #tpu.dot_dimension_numbers<[1], [0], [0], [1], [0, 0, 1, 1], [], []>} : vector<16x64xbf16>, vector<64x32xbf16>, vector<16x32xf32> -> vector<16x32xf32>
    %18 = vector.broadcast %16 : vector<1x32xf32> to vector<16x32xf32>
    %19 = arith.addf %17, %18 : vector<16x32xf32>
    %c0_12 = arith.constant 0 : index
    %c0_13 = arith.constant 0 : index
    %20 = vector.load %arg6[%c0_12, %c0_13] : memref<16x32xf32, #tpu.memory_space<vmem>>, vector<16x32xf32>
    tpu.vector_store %arg6[%c0_12, %c0_13], %19 {strides = array<i32>} : memref<16x32xf32, #tpu.memory_space<vmem>>, vector<16x32xf32>,
    return
  }
  func.func @transform_0(%arg0: i32) -> (i32, i32) {
    %c0_i32 = arith.constant 0 : i32
    %c0_i32_0 = arith.constant 0 : i32
    return %arg0, %c0_i32 : i32, i32
  }
  func.func @transform_1(%arg0: i32) -> (i32, i32) {
    %c0_i32 = arith.constant 0 : i32
    %c0_i32_0 = arith.constant 0 : i32
    %c0_i32_1 = arith.constant 0 : i32
    return %c0_i32, %c0_i32_0 : i32, i32
  }
  func.func @transform_2(%arg0: i32) -> (i32, i32) {
    %c0_i32 = arith.constant 0 : i32
    %c0_i32_0 = arith.constant 0 : i32
    %c0_i32_1 = arith.constant 0 : i32
    return %c0_i32, %c0_i32_0 : i32, i32
  }
  func.func @transform_3(%arg0: i32) -> (i32, i32) {
    %c0_i32 = arith.constant 0 : i32
    %c0_i32_0 = arith.constant 0 : i32
    %c0_i32_1 = arith.constant 0 : i32
    return %c0_i32, %c0_i32_0 : i32, i32
  }
  func.func @transform_4(%arg0: i32) -> (i32, i32) {
    %c0_i32 = arith.constant 0 : i32
    %c0_i32_0 = arith.constant 0 : i32
    %c0_i32_1 = arith.constant 0 : i32
    return %c0_i32, %c0_i32_0 : i32, i32
  }
  func.func @transform_5(%arg0: i32) -> (i32, i32) {
    %c0_i32 = arith.constant 0 : i32
    %c0_i32_0 = arith.constant 0 : i32
    return %arg0, %c0_i32 : i32, i32
  }
}

</mosaic_0001>

<llo_original>
// kernel: tpu_custom_call.1
$region0: #{tpu_custom_call.1}
  #allocation0 [shape = 'u32[]', space=smem, size = 0x4, offset = 0x4, fixed_abs, tag = 'smem constant byte address 0x4 - core index']
  #allocation1 [shape = 'u32[144,128]{1,0:T(1,128)}', space=vmem, size = 0x12000, scoped, tag = 'internal scratch']
  %s0 = inlined_call_operand.vmem [shape: f32[16,32], index: 0, kind: input, shape index: {}]
  %s1 = inlined_call_operand.vmem [shape: bf16[32,64], index: 1, kind: input, shape index: {}]
  %s2 = inlined_call_operand.vmem [shape: f32[1,64], index: 2, kind: input, shape index: {}]
  %s3 = inlined_call_operand.vmem [shape: bf16[64,32], index: 3, kind: input, shape index: {}]
  %s4 = inlined_call_operand.vmem [shape: f32[1,32], index: 4, kind: input, shape index: {}]
  %s5 = inlined_call_operand.hbm [shape: f32[16,32], index: 5, kind: output, shape index: {}]
  %s6 = sld [smem:[#allocation0]]
  $region30: #{tpu_custom_call.1} parent=0
    _
  %s8 = ssub.s32 1, %s6
  %s9 = scalar_select 0, %s8, %s6
  $region1: #{tpu_custom_call.1} parent=0
    #allocation2 [shape = 'u8[8192]{0}', space=vmem, size = 0x2000, scoped, tag = 'output window, operand 0, single buffered']
    #allocation3 [shape = 's32[1]{0}', space=sflag, size = 0x4, scoped, tag = 'scoped memory for tpu_custom_call.1']
    %10 = vsyncpa [#allocation3], 0
    // Predicated region
    $region2: #{tpu_custom_call.1} parent=1 // pred_check
      _
    $region3: #{tpu_custom_call.1} parent=1 // pred_check_branch
      %12 = sbr.rel (0) target = $region5
    $region4: #{tpu_custom_call.1} parent=1 // pred_region
      _
    $region5: #{tpu_custom_call.1} parent=1 // pred_fallthru
      _
    // Predicated region
    $region6: #{tpu_custom_call.1} parent=1 // pred_check
      _
    $region7: #{tpu_custom_call.1} parent=1 // pred_check_branch
      %14 = sbr.rel (0) target = $region9
    $region8: #{tpu_custom_call.1} parent=1 // pred_region
      _
    $region9: #{tpu_custom_call.1} parent=1 // pred_fallthru
      _
    // Predicated region
    $region10: #{tpu_custom_call.1} parent=1 // pred_check
      _
    $region11: #{tpu_custom_call.1} parent=1 // pred_check_branch
      %16 = sbr.rel (0) target = $region13
    $region12: #{tpu_custom_call.1} parent=1 // pred_region
      _
    $region13: #{tpu_custom_call.1} parent=1 // pred_fallthru
      _
    // Predicated region
    $region14: #{tpu_custom_call.1} parent=1 // pred_check
      _
    $region15: #{tpu_custom_call.1} parent=1 // pred_check_branch
      %18 = sbr.rel (0) target = $region17
    $region16: #{tpu_custom_call.1} parent=1 // pred_region
      _
    $region17: #{tpu_custom_call.1} parent=1 // pred_fallthru
      _
    // Predicated region
    $region18: #{tpu_custom_call.1} parent=1 // pred_check
      _
    $region19: #{tpu_custom_call.1} parent=1 // pred_check_branch
      %20 = sbr.rel (0) target = $region21
    $region20: #{tpu_custom_call.1} parent=1 // pred_region
      _
    $region21: #{tpu_custom_call.1} parent=1 // pred_fallthru
      _
    %v22 = vld [vmem:[%s0] sm:$0xff]
    %v23 = vld [vmem:[%s0 + $0x8] sm:$0xff]
    %v24 = vpack.c.bf16 %v23, %v22
    %v25 = vld [vmem:[%s1] sm:$0xf]
    %v26 = vld [vmem:[%s1 + $0x4] sm:$0xf]
    %v27 = vld [vmem:[%s1 + $0x8] sm:$0xf]
    %v28 = vld [vmem:[%s1 + $0xc] sm:$0xf]
    %v29 = vld [vmem:[%s2] sm:$0x1]
    %v31 = vlaneseq
    %v32 = vshrl.u32 %v31, 7
    %v33 = vsub.s32 0, %v32
    %v34 = vrot.slane %v29, %v33
    %v40 = vunpack.c.l.b16 %v25
    %v41 = vunpack.c.l.b16 %v26
    %v42 = vunpack.c.l.b16 %v27
    %v43 = vunpack.c.l.b16 %v28
    %v44 = vpack.c.b16 %v41, %v40
    %v45 = vpack.c.b16 %v43, %v42
    %vm48 = vcmask 261120
    %v50 = vsel %vm48, %v24, 0
    %52 = vmatprep.subr.bf16.mxu0 0
    %53 = vmatpush1.bf16.msra.mxu0 %v44
    %54 = vmatprep.subr.bf16.mxu0 0
    %55 = vmatpush1.bf16.msra.mxu0 %v45
    %56 = vmatprep.subr.bf16.mxu0 0
    %57 = vmatpush1.bf16.msra.mxu0 0
    %58 = vmatprep.subr.bf16.mxu0 0
    %59 = vmatpush1.bf16.msra.mxu0 0
    %60 = vmatprep.subr.bf16.mxu0 0
    %61 = vmatpush1.bf16.msra.mxu0 0
    %62 = vmatprep.subr.bf16.mxu0 0
    %63 = vmatpush1.bf16.msra.mxu0 0
    %64 = vmatprep.subr.bf16.mxu0 0
    %65 = vmatpush1.bf16.msra.mxu0 0
    %66 = vmatprep.subr.bf16.mxu0 0
    %67 = vmatpush1.bf16.msra.mxu0 0
    %68 = vmatprep.subr.bf16.mxu0 0
    %69 = vmatpush1.bf16.msra.mxu0 0
    %70 = vmatprep.subr.bf16.mxu0 0
    %71 = vmatpush1.bf16.msra.mxu0 0
    %72 = vmatprep.subr.bf16.mxu0 0
    %73 = vmatpush1.bf16.msra.mxu0 0
    %74 = vmatprep.subr.bf16.mxu0 0
    %75 = vmatpush1.bf16.msra.mxu0 0
    %76 = vmatprep.subr.bf16.mxu0 0
    %77 = vmatpush1.bf16.msra.mxu0 0
    %78 = vmatprep.subr.bf16.mxu0 0
    %79 = vmatpush1.bf16.msra.mxu0 0
    %80 = vmatprep.subr.bf16.mxu0 0
    %81 = vmatpush1.bf16.msra.mxu0 0
    %82 = vmatprep.subr.bf16.mxu0 0
    %83 = vmatpush1.bf16.msra.mxu0 0
    %84 = vmatprep.mubr.bf16.mxu0 0
    %85 = vmatmul.mubr.bf16.gmra.mrb[0].mxu0 %v50
    %v86 = vpop.f32.mrb[0].mxu0
    %v87 = vadd.f32 %v34, %v86
    %v88 = vpop.f32.mrb[0].mxu0
    %v89 = vpop.f32.mrb[0].mxu0
    %v90 = vadd.f32 %v34, %v89
    %v91 = vpop.f32.mrb[0].mxu0
    %92 = vdwg.mxu0
    %v93 = vsub.f32 0.0, %v87
    %v94 = vsub.f32 0.0, %v90
    %v95 = vmul.f32 %v93, 1.442695
    %v96 = vpow.pop %v95
    %v97 = vmul.f32 %v94, 1.442695
    %v98 = vpow.pop %v97
    %v99 = vadd.f32 %v96, 1.0
    %v100 = vadd.f32 %v98, 1.0
    %v101 = vrcp.pop %v99
    %v102 = vrcp.pop %v100
    %v103 = vmul.f32 %v87, %v101
    %v104 = vmul.f32 %v90, %v102
    %v105 = vpack.c.bf16 %v104, %v103
    %v106 = vld [vmem:[%s3] sm:$0xf]
    %v107 = vld [vmem:[%s3 + $0x4] sm:$0xf]
    %v108 = vld [vmem:[%s3 + $0x8] sm:$0xf]
    %v109 = vld [vmem:[%s3 + $0xc] sm:$0xf]
    %v110 = vld [vmem:[%s3 + $0x10] sm:$0xf]
    %v111 = vld [vmem:[%s3 + $0x14] sm:$0xf]
    %v112 = vld [vmem:[%s3 + $0x18] sm:$0xf]
    %v113 = vld [vmem:[%s3 + $0x1c] sm:$0xf]
    %v114 = vld [vmem:[%s4] sm:$0x1]
    %v116 = vlaneseq
    %v117 = vshrl.u32 %v116, 7
    %v118 = vsub.s32 0, %v117
    %v119 = vrot.slane %v114, %v118
    %v129 = vunpack.c.l.b16 %v106
    %v130 = vunpack.c.l.b16 %v107
    %v131 = vunpack.c.l.b16 %v108
    %v132 = vunpack.c.l.b16 %v109
    %v133 = vunpack.c.l.b16 %v110
    %v134 = vunpack.c.l.b16 %v111
    %v135 = vunpack.c.l.b16 %v112
    %v136 = vunpack.c.l.b16 %v113
    %v137 = vpack.c.b16 %v130, %v129
    %v138 = vpack.c.b16 %v132, %v131
    %v139 = vpack.c.b16 %v134, %v133
    %v140 = vpack.c.b16 %v136, %v135
    %vm145 = vcmask 523264
    %v147 = vsel %vm145, %v105, 0
    %149 = vmatprep.subr.bf16.mxu0 0
    %150 = vmatpush1.bf16.msra.mxu0 %v137
    %151 = vmatprep.subr.bf16.mxu0 0
    %152 = vmatpush1.bf16.msra.mxu0 %v138
    %153 = vmatprep.subr.bf16.mxu0 0
    %154 = vmatpush1.bf16.msra.mxu0 %v139
    %155 = vmatprep.subr.bf16.mxu0 0
    %156 = vmatpush1.bf16.msra.mxu0 %v140
    %157 = vmatprep.subr.bf16.mxu0 0
    %158 = vmatpush1.bf16.msra.mxu0 0
    %159 = vmatprep.subr.bf16.mxu0 0
    %160 = vmatpush1.bf16.msra.mxu0 0
    %161 = vmatprep.subr.bf16.mxu0 0
    %162 = vmatpush1.bf16.msra.mxu0 0
    %163 = vmatprep.subr.bf16.mxu0 0
    %164 = vmatpush1.bf16.msra.mxu0 0
    %165 = vmatprep.subr.bf16.mxu0 0
    %166 = vmatpush1.bf16.msra.mxu0 0
    %167 = vmatprep.subr.bf16.mxu0 0
    %168 = vmatpush1.bf16.msra.mxu0 0
    %169 = vmatprep.subr.bf16.mxu0 0
    %170 = vmatpush1.bf16.msra.mxu0 0
    %171 = vmatprep.subr.bf16.mxu0 0
    %172 = vmatpush1.bf16.msra.mxu0 0
    %173 = vmatprep.subr.bf16.mxu0 0
    %174 = vmatpush1.bf16.msra.mxu0 0
    %175 = vmatprep.subr.bf16.mxu0 0
    %176 = vmatpush1.bf16.msra.mxu0 0
    %177 = vmatprep.subr.bf16.mxu0 0
    %178 = vmatpush1.bf16.msra.mxu0 0
    %179 = vmatprep.subr.bf16.mxu0 0
    %180 = vmatpush1.bf16.msra.mxu0 0
    %181 = vmatprep.mubr.bf16.mxu0 0
    %182 = vmatmul.mubr.bf16.gmra.mrb[0].mxu0 %v147
    %v183 = vpop.f32.mrb[0].mxu0
    %v184 = vadd.f32 %v119, %v183
    %v185 = vpop.f32.mrb[0].mxu0
    %v186 = vpop.f32.mrb[0].mxu0
    %v187 = vadd.f32 %v119, %v186
    %v188 = vpop.f32.mrb[0].mxu0
    %189 = vdwg.mxu0
    %190 = vst.msk [vmem:[#allocation2] sm:$0xff] %vm48, %v184
    %191 = vst.msk [vmem:[#allocation2 + $0x8] sm:$0xff] %vm48, %v187
    // Predicated region
    $region22: #{tpu_custom_call.1} parent=1 // pred_check
      _
    $region23: #{tpu_custom_call.1} parent=1 // pred_check_branch
      %193 = sbr.rel (0) target = $region25
    $region24: #{tpu_custom_call.1} parent=1 // pred_region
      %s195 = ssub.s32 256, 256
      %196 = vsyncadd [#allocation3], %s195
      %s197 = sshll.u32 [#allocation2], 4
      %s198 = int_to_ptr.vmem [resolvable:$true] %s197
      %203 = dma.vmem_to_hbm [thread:$0]  %s198, 256, %s5, [#allocation3], 128, 128, 8
    $region25: #{tpu_custom_call.1} parent=1 // pred_fallthru
      _
    // Predicated region
    $region26: #{tpu_custom_call.1} parent=1 // pred_check
      _
    $region27: #{tpu_custom_call.1} parent=1 // pred_check_branch
      %205 = sbr.rel (0) target = $region29
    $region28: #{tpu_custom_call.1} parent=1 // pred_region
      %206 = dma.done [#allocation3], 256
    $region29: #{tpu_custom_call.1} parent=1 // pred_fallthru
      _
    %207 = vsyncpa [#allocation3], 1

</llo_original>
